<compile_context>
chip_gen: v6e
topology: v6e:2x2x1
jax: 0.10.0
libtpu: 0.0.40
codegen_flags: <defaults>
</compile_context>

<pallas_src>
import jax
import jax.numpy as jnp
from jax.experimental import pallas as pl
from jax.experimental.pallas import tpu as pltpu


_TB_CAP = 2048            # beyond this the f32 accumulator cost dominates
_TB_RESIDENT_MIN = 256    # resident-W1 path only with an MXU-friendly batch tile
_EPI_CHUNK_MAX = 512      # lane-chunk width for the tanh/reduce epilogue


def _make_kernel(epi_chunk, n_epi_chunks):
    def kernel(x_ref, w1_ref, b1_ref, w2t_ref, b2_ref, o_ref, acc_ref):
        k = pl.program_id(1)

        @pl.when(k == 0)
        def _():
            # Fold b1 into the accumulator init: replaces the zero-fill with a
            # useful store and removes a (tb, H) add from the epilogue.
            acc_ref[...] = jnp.broadcast_to(
                b1_ref[...].astype(jnp.float32), acc_ref.shape
            )

        # Operands stay in their native dtype on the MXU; accumulation is f32.
        acc_ref[...] += jnp.dot(
            x_ref[...], w1_ref[...], preferred_element_type=jnp.float32
        )

        @pl.when(k == pl.num_programs(1) - 1)
        def _():
            # H -> 1 projection as tanh -> VPU multiply -> lane reduction,
            # streamed in lane-aligned chunks so no (tb, H) f32 temporary
            # materializes for large batch tiles. Chunk count is static, so a
            # plain Python loop gives straight-line code with static slices.
            y = jnp.zeros((acc_ref.shape[0], 1), jnp.float32)
            for c in range(n_epi_chunks):
                sl = slice(c * epi_chunk, (c + 1) * epi_chunk)
                h = jnp.tanh(acc_ref[:, sl])
                w = w2t_ref[:, sl].astype(jnp.float32)
                y = y + jnp.sum(h * w, axis=-1, keepdims=True)
            o_ref[...] = (y + b2_ref[0, 0]).astype(o_ref.dtype)

    return kernel


def _vmem_budget_and_cap():
    """(soft working budget, physical VMEM capacity) in bytes, per generation."""
    try:
        cap = int(pltpu.get_tpu_info().vmem_capacity_bytes)
    except Exception:  # pragma: no cover - conservative fallback (v7x per-TC size)
        cap = 64 * 1024 * 1024
    budget = min(100 * 1024 * 1024, int(cap * 0.75))
    return budget, cap


def _epi_chunk(H):
    """Lane-aligned epilogue chunk (width, count) with width * count == H."""
    if H <= _EPI_CHUNK_MAX:
        return H, 1
    for c in (512, 384, 256, 128):
        if H % c == 0:
            return c, H // c
    return H, 1  # irregular H: single chunk (cost is accounted for in `est`)


def _aligned_divisors(dim, align, cap):
    """Tile candidates for `dim`: the full dim (if <= cap) plus every
    align-multiple divisor <= cap, descending. Falls back to [dim] (full extent
    is always layout-legal)."""
    cands = set()
    if dim <= cap:
        cands.add(dim)
    t = align
    lim = min(cap, dim)
    while t <= lim:
        if dim % t == 0:
            cands.add(t)
        t += align
    if not cands:
        cands.add(dim)
    return sorted(cands, reverse=True)


def _select_tiles(B, H, x_b, w_b, budget, epi_chunk, tb=None, tk=None):
    """Pick (tb, tk) so the double-buffered tiles + f32 accumulator + epilogue
    temporaries fit `budget`. Returns (tb, tk, vmem_estimate_bytes)."""

    def est(tb_, tk_):
        return (
            2 * tb_ * tk_ * x_b          # x tile (double-buffered)
            + 2 * tk_ * H * w_b          # W1 tile (double-buffered)
            + tb_ * H * 4                # f32 accumulator scratch
            + 2 * tb_ * epi_chunk * 4    # epilogue tanh / mul temporaries
            + 2 * 2 * 8 * H * w_b        # b1 + W2^T rows (8-sublane padded, x2 buf)
            + 2 * tb_ * 128 * 4          # output tile (lane-padded, x2 buf)
        )

    if tb is not None or tk is not None:
        tb = B if tb is None else tb
        tk = H if tk is None else tk
        return tb, tk, est(tb, tk)

    tb_cands = _aligned_divisors(B, 8, min(B, _TB_CAP))
    tk_cands = _aligned_divisors(H, 128, H)

    # 1) Resident-W1 path: tk == H keeps W1's block index constant over the
    #    whole grid, so W1 is DMA'd exactly once (H^2 HBM traffic instead of
    #    (B/tb) * H^2) and the K axis / accumulator RMW collapses.
    for tb_ in tb_cands:
        if tb_ >= min(B, _TB_RESIDENT_MIN) and est(tb_, H) <= budget:
            return tb_, H, est(tb_, H)

    # 2) Streaming path: maximize the batch tile first (fewer W1 re-streams),
    #    then the contraction tile (fewer accumulator RMW passes).
    for tb_ in tb_cands:
        for tk_ in tk_cands:
            if est(tb_, tk_) <= budget:
                return tb_, tk_, est(tb_, tk_)

    # 3) Nothing fits the soft budget: smallest tiles; caller checks physical.
    tb_, tk_ = tb_cands[-1], tk_cands[-1]
    return tb_, tk_, est(tb_, tk_)


def regression_head(x, w1, b1, w2, b2, *, tb=None, tk=None):
    """x: [B, H] -> regression output [B, 1] (float32)."""
    B, H = x.shape
    assert w1.shape == (H, H)

    # Present W2 as a (1, H) row so the kernel does mul + lane-reduce instead
    # of a width-1 MXU matmul.
    w2t = jnp.reshape(w2, (1, H))
    b1 = jnp.reshape(b1, (1, H))
    b2 = jnp.reshape(b2, (1, 1)).astype(jnp.float32)

    x_b = jnp.dtype(x.dtype).itemsize
    w_b = jnp.dtype(w1.dtype).itemsize

    budget, phys_cap = _vmem_budget_and_cap()
    epi_chunk, n_epi = _epi_chunk(H)
    tb, tk, est = _select_tiles(B, H, x_b, w_b, budget, epi_chunk, tb=tb, tk=tk)

    if B % tb or H % tk:
        raise ValueError(
            f"tile sizes must divide the inputs: B={B}, tb={tb}, H={H}, tk={tk}"
        )
    if est > phys_cap:
        raise ValueError(
            f"estimated VMEM use {est / 2**20:.1f} MiB exceeds physical VMEM "
            f"{phys_cap / 2**20:.1f} MiB; reduce tb/tk or the hidden size"
        )

    # vmem_limit hint: headroom over the estimate, never below it, capped just
    # under physical capacity.
    vmem_limit = int(min(phys_cap - (2 << 20), max(32 << 20, int(1.25 * est))))
    vmem_limit = max(vmem_limit, est)

    grid = (B // tb, H // tk)  # batch outer (parallel), contraction inner
    kernel = _make_kernel(epi_chunk, n_epi)

    return pl.pallas_call(
        kernel,
        out_shape=jax.ShapeDtypeStruct((B, 1), jnp.float32),
        grid_spec=pltpu.PrefetchScalarGridSpec(
            num_scalar_prefetch=0,
            grid=grid,
            in_specs=[
                pl.BlockSpec((tb, tk), lambda i, k: (i, k)),        # x tile
                pl.BlockSpec((tk, H), lambda i, k: (k, 0)),         # W1 tile
                pl.BlockSpec((1, H), lambda i, k: (0, 0)),          # b1 row
                pl.BlockSpec((1, H), lambda i, k: (0, 0)),          # W2^T row
                pl.BlockSpec(memory_space=pltpu.MemorySpace.SMEM),  # b2 scalar
            ],
            out_specs=pl.BlockSpec((tb, 1), lambda i, k: (i, 0)),
            scratch_shapes=[pltpu.VMEM((tb, H), jnp.float32)],
        ),
        compiler_params=pltpu.CompilerParams(
            dimension_semantics=("parallel", "arbitrary"),
            vmem_limit_bytes=vmem_limit,
        ),
    )(x, w1, b1, w2t, b2)


def regression_head_reference(x, w1, b1, w2, b2):
    h = jnp.tanh(x.astype(jnp.float32) @ w1 + b1)
    return h @ w2 + b2


if __name__ == "__main__":
    key = jax.random.PRNGKey(0)

    # Check 1: module-consistent small shapes (batch=2, hidden=32); single grid
    # step, resident-W1 path, single-chunk epilogue.
    batch, hidden = 2, 32
    kx, kw1, kb1, kw2, kb2 = jax.random.split(key, 5)
    x = jax.random.normal(kx, (batch, hidden), dtype=jnp.float32)
    w1 = jax.random.normal(kw1, (hidden, hidden), dtype=jnp.float32) * 0.02
    b1 = jax.random.normal(kb1, (1, hidden), dtype=jnp.float32) * 0.02
    w2 = jax.random.normal(kw2, (hidden, 1), dtype=jnp.float32) * 0.02
    b2 = jax.random.normal(kb2, (1, 1), dtype=jnp.float32) * 0.02

    out = jax.block_until_ready(regression_head(x, w1, b1, w2, b2))
    ref = regression_head_reference(x, w1, b1, w2, b2)
    assert out.shape == (batch, 1)
    assert jnp.allclose(out, ref, atol=1e-4, rtol=1e-4), (out, ref)

    # Check 2: forced (batch x contraction) tiling -> exercises the k==0
    # bias-fold init, accumulation, and k==last finalize across multiple K steps.
    B2, H2 = 16, 256
    ks = jax.random.split(key, 6)
    x2 = jax.random.normal(ks[1], (B2, H2), dtype=jnp.float32)
    w1_2 = jax.random.normal(ks[2], (H2, H2), dtype=jnp.float32) * 0.02
    b1_2 = jax.random.normal(ks[3], (1, H2), dtype=jnp.float32) * 0.02
    w2_2 = jax.random.normal(ks[4], (H2, 1), dtype=jnp.float32) * 0.02
    b2_2 = jax.random.normal(ks[5], (1, 1), dtype=jnp.float32) * 0.02

    out2 = jax.block_until_ready(
        regression_head(x2, w1_2, b1_2, w2_2, b2_2, tb=8, tk=128)
    )
    ref2 = regression_head_reference(x2, w1_2, b1_2, w2_2, b2_2)
    assert out2.shape == (B2, 1)
    assert jnp.allclose(out2, ref2, atol=1e-4, rtol=1e-4), (out2, ref2)

    # Check 3: automatic (generation-aware) tile selection + lane-chunked
    # epilogue (H > 512 -> 2 chunks), resident-W1 path.
    B3, H3 = 32, 1024
    ks3 = jax.random.split(jax.random.PRNGKey(3), 5)
    x3 = jax.random.normal(ks3[0], (B3, H3), dtype=jnp.float32)
    w1_3 = jax.random.normal(ks3[1], (H3, H3), dtype=jnp.float32) * 0.02
    b1_3 = jax.random.normal(ks3[2], (1, H3), dtype=jnp.float32) * 0.02
    w2_3 = jax.random.normal(ks3[3], (H3, 1), dtype=jnp.float32) * 0.02
    b2_3 = jax.random.normal(ks3[4], (1, 1), dtype=jnp.float32) * 0.02

    out3 = jax.block_until_ready(regression_head(x3, w1_3, b1_3, w2_3, b2_3))
    ref3 = regression_head_reference(x3, w1_3, b1_3, w2_3, b2_3)
    assert out3.shape == (B3, 1)
    assert jnp.allclose(out3, ref3, atol=1e-3, rtol=1e-3), (out3, ref3)

    print("KERNEL_OK")
</pallas_src>

<mosaic_0001>
module attributes {stable_mosaic.version = 11 : i64} {
  func.func @kernel(%arg0: i32, %arg1: i32, %arg2: memref<2x32xf32, #tpu.memory_space<vmem>>, %arg3: memref<32x32xf32, #tpu.memory_space<vmem>>, %arg4: memref<1x32xf32, #tpu.memory_space<vmem>>, %arg5: memref<1x32xf32, #tpu.memory_space<vmem>>, %arg6: memref<1x1xf32, #tpu.memory_space<smem>>, %arg7: memref<2x1xf32, #tpu.memory_space<vmem>>, %arg8: memref<2x32xf32, #tpu.memory_space<vmem>>) attributes {dimension_semantics = [#tpu.dimension_semantics<parallel>, #tpu.dimension_semantics<arbitrary>], iteration_bounds = array<i64: 1, 1>, scalar_prefetch = 0 : i64, scratch_operands = 1 : i64, tpu.core_type = #tpu.core_type<tc>, window_params = [{transform_indices = @transform_0, window_bounds = array<i64: 2, 32>}, {transform_indices = @transform_1, window_bounds = array<i64: 32, 32>}, {pipeline_mode = #tpu.pipeline_mode<synchronous>, transform_indices = @transform_2, window_bounds = array<i64: 1, 32>}, {pipeline_mode = #tpu.pipeline_mode<synchronous>, transform_indices = @transform_3, window_bounds = array<i64: 1, 32>}, {transform_indices = @transform_4, window_bounds = array<i64: 1, 1>}, {transform_indices = @transform_5, window_bounds = array<i64: 2, 1>}]} {
    %c0_i32 = arith.constant 0 : i32
    %0 = arith.cmpi eq, %arg1, %c0_i32 : i32
    %1 = arith.extui %0 : i1 to i32
    %c0_i32_0 = arith.constant 0 : i32
    %2 = arith.cmpi ne, %1, %c0_i32_0 : i32
    scf.if %2 {
      %c0_10 = arith.constant 0 : index
      %c0_11 = arith.constant 0 : index
      %12 = vector.load %arg4[%c0_10, %c0_11] : memref<1x32xf32, #tpu.memory_space<vmem>>, vector<1x32xf32>
      %13 = vector.shape_cast %12 : vector<1x32xf32> to vector<1x32xf32>
      %14 = vector.broadcast %13 : vector<1x32xf32> to vector<2x32xf32>
      %c0_12 = arith.constant 0 : index
      %c0_13 = arith.constant 0 : index
      %15 = vector.load %arg8[%c0_12, %c0_13] : memref<2x32xf32, #tpu.memory_space<vmem>>, vector<2x32xf32>
      tpu.vector_store %arg8[%c0_12, %c0_13], %14 {strides = array<i32>} : memref<2x32xf32, #tpu.memory_space<vmem>>, vector<2x32xf32>,
    } else {
    }
    %c0 = arith.constant 0 : index
    %c0_1 = arith.constant 0 : index
    %3 = vector.load %arg8[%c0, %c0_1] : memref<2x32xf32, #tpu.memory_space<vmem>>, vector<2x32xf32>
    %c0_2 = arith.constant 0 : index
    %c0_3 = arith.constant 0 : index
    %4 = vector.load %arg2[%c0_2, %c0_3] : memref<2x32xf32, #tpu.memory_space<vmem>>, vector<2x32xf32>
    %c0_4 = arith.constant 0 : index
    %c0_5 = arith.constant 0 : index
    %5 = vector.load %arg3[%c0_4, %c0_5] : memref<32x32xf32, #tpu.memory_space<vmem>>, vector<32x32xf32>
    %cst = arith.constant dense<0.000000e+00> : vector<2x32xf32>
    %6 = tpu.matmul %4, %5, %cst {dimension_numbers = #tpu.dot_dimension_numbers<[1], [0], [0], [1], [0, 0, 1, 1], [], []>} : vector<2x32xf32>, vector<32x32xf32>, vector<2x32xf32> -> vector<2x32xf32>
    %7 = arith.addf %3, %6 : vector<2x32xf32>
    %c0_6 = arith.constant 0 : index
    %c0_7 = arith.constant 0 : index
    %8 = vector.load %arg8[%c0_6, %c0_7] : memref<2x32xf32, #tpu.memory_space<vmem>>, vector<2x32xf32>
    tpu.vector_store %arg8[%c0_6, %c0_7], %7 {strides = array<i32>} : memref<2x32xf32, #tpu.memory_space<vmem>>, vector<2x32xf32>,
    %c0_i32_8 = arith.constant 0 : i32
    %9 = arith.cmpi eq, %arg1, %c0_i32_8 : i32
    %10 = arith.extui %9 : i1 to i32
    %c0_i32_9 = arith.constant 0 : i32
    %11 = arith.cmpi ne, %10, %c0_i32_9 : i32
    scf.if %11 {
      %cst_10 = arith.constant 0.000000e+00 : f32
      %12 = vector.broadcast %cst_10 : f32 to vector<2x1xf32>
      %c0_11 = arith.constant 0 : index
      %c0_12 = arith.constant 0 : index
      %13 = vector.load %arg8[%c0_11, %c0_12] : memref<2x32xf32, #tpu.memory_space<vmem>>, vector<2x32xf32>
      %14 = math.tanh %13 : vector<2x32xf32>
      %c0_13 = arith.constant 0 : index
      %c0_14 = arith.constant 0 : index
      %15 = vector.load %arg5[%c0_13, %c0_14] : memref<1x32xf32, #tpu.memory_space<vmem>>, vector<1x32xf32>
      %16 = vector.broadcast %15 : vector<1x32xf32> to vector<2x32xf32>
      %17 = arith.mulf %14, %16 : vector<2x32xf32>
      %cst_15 = arith.constant dense<0.000000e+00> : vector<2xf32>
      %18 = vector.multi_reduction <add>, %17, %cst_15 [1] : vector<2x32xf32> to vector<2xf32>
      %19 = vector.shape_cast %18 : vector<2xf32> to vector<2x1xf32>
      %20 = arith.addf %12, %19 : vector<2x1xf32>
      %c0_16 = arith.constant 0 : index
      %c0_17 = arith.constant 0 : index
      %21 = memref.load %arg6[%c0_16, %c0_17] : memref<1x1xf32, #tpu.memory_space<smem>>
      %22 = vector.broadcast %21 : f32 to vector<2x1xf32>
      %23 = arith.addf %20, %22 : vector<2x1xf32>
      %c0_18 = arith.constant 0 : index
      %c0_19 = arith.constant 0 : index
      %24 = vector.load %arg7[%c0_18, %c0_19] : memref<2x1xf32, #tpu.memory_space<vmem>>, vector<2x1xf32>
      tpu.vector_store %arg7[%c0_18, %c0_19], %23 {strides = array<i32>} : memref<2x1xf32, #tpu.memory_space<vmem>>, vector<2x1xf32>,
    } else {
    }
    return
  }
  func.func @transform_0(%arg0: i32, %arg1: i32) -> (i32, i32) {
    %c0_i32 = arith.constant 0 : i32
    return %arg0, %arg1 : i32, i32
  }
  func.func @transform_1(%arg0: i32, %arg1: i32) -> (i32, i32) {
    %c0_i32 = arith.constant 0 : i32
    %c0_i32_0 = arith.constant 0 : i32
    return %arg1, %c0_i32 : i32, i32
  }
  func.func @transform_2(%arg0: i32, %arg1: i32) -> (i32, i32) {
    %c0_i32 = arith.constant 0 : i32
    %c0_i32_0 = arith.constant 0 : i32
    %c0_i32_1 = arith.constant 0 : i32
    return %c0_i32, %c0_i32_0 : i32, i32
  }
  func.func @transform_3(%arg0: i32, %arg1: i32) -> (i32, i32) {
    %c0_i32 = arith.constant 0 : i32
    %c0_i32_0 = arith.constant 0 : i32
    %c0_i32_1 = arith.constant 0 : i32
    return %c0_i32, %c0_i32_0 : i32, i32
  }
  func.func @transform_4(%arg0: i32, %arg1: i32) -> (i32, i32) {
    %c0_i32 = arith.constant 0 : i32
    %c0_i32_0 = arith.constant 0 : i32
    %c0_i32_1 = arith.constant 0 : i32
    return %c0_i32, %c0_i32_0 : i32, i32
  }
  func.func @transform_5(%arg0: i32, %arg1: i32) -> (i32, i32) {
    %c0_i32 = arith.constant 0 : i32
    %c0_i32_0 = arith.constant 0 : i32
    return %arg0, %c0_i32 : i32, i32
  }
}

</mosaic_0001>

<llo_original>
// kernel: tpu_custom_call.1
$region0: #{tpu_custom_call.1}
  #allocation0 [shape = 'u32[]', space=smem, size = 0x4, offset = 0x4, fixed_abs, tag = 'smem constant byte address 0x4 - core index']
  #allocation1 [shape = 'u32[144,128]{1,0:T(1,128)}', space=vmem, size = 0x12000, scoped, tag = 'internal scratch']
  #allocation2 [shape = 'f32[2,32]{1,0:T(2,128)}', space=vmem, size = 0x400, scoped, tag = 'scratch operand']
  #allocation3 [shape = 'f32[1,1]{1,0:T(1,128)S(6)}', space=smem, size = 0x200, scoped, tag = 'scoped memory for tpu_custom_call.1']
  %s0 = inlined_call_operand.vmem [shape: f32[2,32], index: 0, kind: input, shape index: {}]
  %s1 = inlined_call_operand.hbm [shape: f32[32,32], index: 1, kind: input, shape index: {}]
  %s2 = inlined_call_operand.vmem [shape: f32[1,32], index: 2, kind: input, shape index: {}]
  %s3 = inlined_call_operand.vmem [shape: f32[1,32], index: 3, kind: input, shape index: {}]
  %s4 = inlined_call_operand.<no memory space> [shape: f32[1,1], index: 4, kind: input, shape index: {}]
  %s5 = inlined_call_operand.vmem [shape: f32[2,1], index: 5, kind: output, shape index: {}]
  %s6 = sld [smem:[#allocation0]]
  $region42: #{tpu_custom_call.1} parent=0
    _
  %s8 = ssub.s32 1, %s6
  %s9 = scalar_select 0, %s8, %s6
  %10 = sst [smem:[#allocation3]] %s4
  $region1: #{tpu_custom_call.1} parent=0
    #allocation4 [shape = 'u8[16384]{0}', space=vmem, size = 0x4000, scoped, tag = 'input window, operand 1, single buffered']
    #allocation5 [shape = 's32[1]{0}', space=sflag, size = 0x4, scoped, tag = 'scoped memory for tpu_custom_call.1']
    %11 = vsyncpa [#allocation5], 0
    // Predicated region
    $region2: #{tpu_custom_call.1} parent=1 // pred_check
      _
    $region3: #{tpu_custom_call.1} parent=1 // pred_check_branch
      %13 = sbr.rel (0) target = $region5
    $region4: #{tpu_custom_call.1} parent=1 // pred_region
      _
    $region5: #{tpu_custom_call.1} parent=1 // pred_fallthru
      _
    // Predicated region
    $region6: #{tpu_custom_call.1} parent=1 // pred_check
      _
    $region7: #{tpu_custom_call.1} parent=1 // pred_check_branch
      %15 = sbr.rel (0) target = $region9
    $region8: #{tpu_custom_call.1} parent=1 // pred_region
      %s17 = ssub.s32 512, 512
      %18 = vsyncadd [#allocation5], %s17
      %s19 = sshll.u32 [#allocation4], 4
      %s20 = int_to_ptr.vmem [resolvable:$true] %s19
      %25 = dma.hbm_to_vmem [thread:$0]  %s1, 512, %s20, [#allocation5], 128, 128, 8
    $region9: #{tpu_custom_call.1} parent=1 // pred_fallthru
      _
    // Predicated region
    $region10: #{tpu_custom_call.1} parent=1 // pred_check
      _
    $region11: #{tpu_custom_call.1} parent=1 // pred_check_branch
      %27 = sbr.rel (0) target = $region13
    $region12: #{tpu_custom_call.1} parent=1 // pred_region
      _
    $region13: #{tpu_custom_call.1} parent=1 // pred_fallthru
      _
    // Predicated region
    $region14: #{tpu_custom_call.1} parent=1 // pred_check
      _
    $region15: #{tpu_custom_call.1} parent=1 // pred_check_branch
      %29 = sbr.rel (0) target = $region17
    $region16: #{tpu_custom_call.1} parent=1 // pred_region
      _
    $region17: #{tpu_custom_call.1} parent=1 // pred_fallthru
      _
    // Predicated region
    $region18: #{tpu_custom_call.1} parent=1 // pred_check
      _
    $region19: #{tpu_custom_call.1} parent=1 // pred_check_branch
      %31 = sbr.rel (0) target = $region21
    $region20: #{tpu_custom_call.1} parent=1 // pred_region
      _
    $region21: #{tpu_custom_call.1} parent=1 // pred_fallthru
      _
    // Predicated region
    $region22: #{tpu_custom_call.1} parent=1 // pred_check
      _
    $region23: #{tpu_custom_call.1} parent=1 // pred_check_branch
      %33 = sbr.rel (0) target = $region25
    $region24: #{tpu_custom_call.1} parent=1 // pred_region
      %34 = dma.done [#allocation5], 512
    $region25: #{tpu_custom_call.1} parent=1 // pred_fallthru
      _
    %p35 = scmp.eq.s32.totalorder 0, 0
    // Predicated region
    $region26: #{tpu_custom_call.1} parent=1 // pred_check
      %p36 = pneg %p35
    $region27: #{tpu_custom_call.1} parent=1 // pred_check_branch
      %38 = sbr.rel (%p36) target = $region29
    $region28: #{tpu_custom_call.1} parent=1 // pred_region
      %v39 = vld [vmem:[%s2] sm:$0x1]
      %v41 = vlaneseq
      %v42 = vshrl.u32 %v41, 7
      %v43 = vsub.s32 0, %v42
      %v44 = vrot.slane %v39, %v43
      %vm46 = vcmask 254976
      %47 = vst.msk [vmem:[#allocation2] sm:$0x3] %vm46, %v44
    $region29: #{tpu_custom_call.1} parent=1 // pred_fallthru
      _
    %v48 = vld [vmem:[#allocation2] sm:$0x3]
    %v49 = vld [vmem:[%s0] sm:$0x3]
    %v50 = vld [vmem:[#allocation4] sm:$0xff]
    %v51 = vld [vmem:[#allocation4 + $0x8] sm:$0xff]
    %v52 = vld [vmem:[#allocation4 + $0x10] sm:$0xff]
    %v53 = vld [vmem:[#allocation4 + $0x18] sm:$0xff]
    %vm54 = vcmask 261120
    %v56 = vsel %vm54, %v49, 0
    %58 = vmatprep.subr.mxu0 0.0
    %59 = vmatpush1.msra.mxu0 0.0
    %60 = vmatprep.subr.mxu0 0.0
    %61 = vmatpush1.msra.mxu0 0.0
    %62 = vmatprep.subr.mxu0 0.0
    %63 = vmatpush1.msra.mxu0 0.0
    %64 = vmatprep.subr.mxu0 0.0
    %65 = vmatpush1.msra.mxu0 0.0
    %66 = vmatprep.subr.mxu0 0.0
    %67 = vmatpush1.msra.mxu0 0.0
    %68 = vmatprep.subr.mxu0 0.0
    %69 = vmatpush1.msra.mxu0 0.0
    %70 = vmatprep.subr.mxu0 0.0
    %71 = vmatpush1.msra.mxu0 0.0
    %72 = vmatprep.subr.mxu0 0.0
    %73 = vmatpush1.msra.mxu0 0.0
    %74 = vmatprep.subr.mxu0 0.0
    %75 = vmatpush1.msra.mxu0 0.0
    %76 = vmatprep.subr.mxu0 0.0
    %77 = vmatpush1.msra.mxu0 0.0
    %78 = vmatprep.subr.mxu0 0.0
    %79 = vmatpush1.msra.mxu0 0.0
    %80 = vmatprep.subr.mxu0 0.0
    %81 = vmatpush1.msra.mxu0 0.0
    %82 = vmatprep.subr.mxu0 0.0
    %83 = vmatpush1.msra.mxu0 %v53
    %84 = vmatprep.subr.mxu0 0.0
    %85 = vmatpush1.msra.mxu0 %v52
    %86 = vmatprep.subr.mxu0 0.0
    %87 = vmatpush1.msra.mxu0 %v51
    %88 = vmatprep.subr.mxu0 0.0
    %89 = vmatpush1.msra.mxu0 %v50
    %90 = vmatprep.subr.mxu0 0.0
    %91 = vmatpush2.msra.mxu0 0.0
    %92 = vmatprep.subr.mxu0 0.0
    %93 = vmatpush2.msra.mxu0 0.0
    %94 = vmatprep.subr.mxu0 0.0
    %95 = vmatpush2.msra.mxu0 0.0
    %96 = vmatprep.subr.mxu0 0.0
    %97 = vmatpush2.msra.mxu0 0.0
    %98 = vmatprep.subr.mxu0 0.0
    %99 = vmatpush2.msra.mxu0 0.0
    %100 = vmatprep.subr.mxu0 0.0
    %101 = vmatpush2.msra.mxu0 0.0
    %102 = vmatprep.subr.mxu0 0.0
    %103 = vmatpush2.msra.mxu0 0.0
    %104 = vmatprep.subr.mxu0 0.0
    %105 = vmatpush2.msra.mxu0 0.0
    %106 = vmatprep.subr.mxu0 0.0
    %107 = vmatpush2.msra.mxu0 0.0
    %108 = vmatprep.subr.mxu0 0.0
    %109 = vmatpush2.msra.mxu0 0.0
    %110 = vmatprep.subr.mxu0 0.0
    %111 = vmatpush2.msra.mxu0 0.0
    %112 = vmatprep.subr.mxu0 0.0
    %113 = vmatpush2.msra.mxu0 0.0
    %114 = vmatprep.subr.mxu0 0.0
    %115 = vmatpush2.msra.mxu0 0.0
    %116 = vmatprep.subr.mxu0 0.0
    %117 = vmatpush2.msra.mxu0 0.0
    %118 = vmatprep.subr.mxu0 0.0
    %119 = vmatpush2.msra.mxu0 0.0
    %120 = vmatprep.subr.mxu0 0.0
    %121 = vmatpush2.msra.mxu0 0.0
    %122 = vmatprep.mubr.f32.mxu0 0.0
    %123 = vmatmul.mubr.f32.gmra.mxu0 %v56
    %v124 = vpop.f32.mrf.mxu0
    %v125 = vadd.f32 0.0, %v124
    %v126 = vpop.f32.mrf.mxu0
    %127 = vdwg.mxu0
    %v128 = vadd.f32 %v48, %v125
    %vm129 = vcmask 254976
    %130 = vst.msk [vmem:[#allocation2] sm:$0x3] %vm129, %v128
    // Predicated region
    $region30: #{tpu_custom_call.1} parent=1 // pred_check
      %p131 = pneg %p35
    $region31: #{tpu_custom_call.1} parent=1 // pred_check_branch
      %133 = sbr.rel (%p131) target = $region33
    $region32: #{tpu_custom_call.1} parent=1 // pred_region
      %v134 = vld [vmem:[#allocation2] sm:$0x3]
      %v135 = vtanh.pop %v134
      %v136 = vld [vmem:[%s3] sm:$0x1]
      %v138 = vlaneseq
      %v139 = vshrl.u32 %v138, 7
      %v140 = vsub.s32 0, %v139
      %v141 = vrot.slane %v136, %v140
      %v143 = vmul.f32 %v135, %v141
      %v144 = vsel %vm129, %v143, 0.0
      %145 = vadd.xlane.f32.xlu0 %v144
      %v146 = vpop.xlane.xlu0 %145
      %v147 = vadd.f32 %v146, 0.0
      %s148 = sld [smem:[#allocation3]]
      %v149 = vstv %s148
      %v150 = vadd.f32 %v147, %v149
      %vm151 = vcmask 1024
      %152 = vst.msk [vmem:[%s5] sm:$0x3] %vm151, %v150
    $region33: #{tpu_custom_call.1} parent=1 // pred_fallthru
      _
    // Predicated region
    $region34: #{tpu_custom_call.1} parent=1 // pred_check
      _
    $region35: #{tpu_custom_call.1} parent=1 // pred_check_branch
      %154 = sbr.rel (0) target = $region37
    $region36: #{tpu_custom_call.1} parent=1 // pred_region
      _
    $region37: #{tpu_custom_call.1} parent=1 // pred_fallthru
      _
    // Predicated region
    $region38: #{tpu_custom_call.1} parent=1 // pred_check
      _
    $region39: #{tpu_custom_call.1} parent=1 // pred_check_branch
      %156 = sbr.rel (0) target = $region41
    $region40: #{tpu_custom_call.1} parent=1 // pred_region
      _
    $region41: #{tpu_custom_call.1} parent=1 // pred_fallthru
      _
    %157 = vsyncpa [#allocation5], 1

</llo_original>
